<compile_context>
chip_gen: v7x
topology: tpu7x:2x2x1
jax: 0.10.0
libtpu: 0.0.40
codegen_flags: <defaults>
</compile_context>

<pallas_src>
import functools

import jax
import jax.numpy as jnp
from jax.experimental import pallas as pl
from jax.experimental.pallas import tpu as pltpu


def _round_up(x, m):
    return (x + m - 1) // m * m


# -----------------------------------------------------------------------------
# Fused kernel: conv-stem (im2col matmul, bf16 -> f32) -> masked GAP
# accumulation -> projection -> DME head (concat as split matmul + 2-layer MLP).
# Grid = (batch, spatial-row tiles).
# -----------------------------------------------------------------------------
def _fused_kernel(patches_ref, stem_w_ref, stem_b_ref, proj_w_ref, proj_b_ref,
                  emb_ref, w1i_ref, w1d_ref, b1_ref, w2_ref, b2_ref,
                  o_ref, acc_ref, *, s_true, tile_s):
    t = pl.program_id(1)

    @pl.when(t == 0)
    def _():
        acc_ref[...] = jnp.zeros_like(acc_ref)

    # conv stem as bf16 matmul on the MXU: (tile_s, K) @ (K, Cs_pad).
    # K (= C*k*k = 36) is the true contraction length; Mosaic pads it only in
    # vregs, there is no K padding in HBM.
    act = jnp.dot(patches_ref[0], stem_w_ref[...],
                  preferred_element_type=jnp.float32)
    act = jnp.maximum(act + stem_b_ref[...], 0.0)            # f32 (tile_s, Cs_pad)

    # masked GAP partial sum as a matmul: (1, tile_s) @ (tile_s, Cs_pad), f32.
    # The mask also excludes spatial padding rows (ReLU(0*W + b) may be != 0),
    # and those rows are exact zeros in HBM so 0*x stays finite.
    row_ids = t * tile_s + jax.lax.broadcasted_iota(jnp.int32, (1, tile_s), 1)
    mask = jnp.where(row_ids < s_true, 1.0, 0.0).astype(jnp.float32)
    acc_ref[...] += jnp.dot(mask, act, preferred_element_type=jnp.float32)

    @pl.when(t == pl.num_programs(1) - 1)
    def _():
        pooled = acc_ref[...] * (1.0 / s_true)                       # (1, Cs_pad) f32
        feat = (jnp.dot(pooled.astype(jnp.bfloat16), proj_w_ref[...],
                        preferred_element_type=jnp.float32)
                + proj_b_ref[...])                                   # (1, F_pad) f32
        emb_b = emb_ref[0]                                           # (1, E) bf16
        h = (jnp.dot(feat.astype(jnp.bfloat16), w1i_ref[...],
                     preferred_element_type=jnp.float32)
             + jnp.dot(emb_b, w1d_ref[...], preferred_element_type=jnp.float32)
             + b1_ref[...])
        h = jnp.maximum(h, 0.0)                                      # (1, H) f32
        res = (jnp.dot(h.astype(jnp.bfloat16), w2_ref[...],
                       preferred_element_type=jnp.float32)
               + b2_ref[...])                                        # (1, NC_pad) f32
        o_ref[0] = res


def fused_forward(patches, dr_emb, p):
    """patches: (B, S, K) bf16 im2col rows; dr_emb: (B, E) bf16 embedding rows."""
    B, S, K = patches.shape
    # Large spatial tiles amortize the ~0.35 us per-grid-step overhead; even a
    # triple-buffered (2048, 36) bf16 block is ~144 KiB, far inside VMEM on
    # every generation (incl. v7x's 64 MiB).
    tile_s = min(2048, _round_up(S, 16))
    S_pad = _round_up(S, tile_s)
    n_tiles = S_pad // tile_s
    if S_pad > S:   # only the spatial axis is (lightly) padded in HBM
        patches = jnp.pad(patches, ((0, 0), (0, S_pad - S), (0, 0)))
    dr_emb3 = dr_emb[:, None, :]                                     # (B, 1, E)

    Cs_pad = p.stem_w.shape[1]
    F_pad = p.proj_w.shape[1]
    H = p.w1_img.shape[1]
    E = p.w1_dr.shape[0]
    NC_pad = p.w2.shape[1]

    inputs = (patches, p.stem_w, p.stem_b, p.proj_w, p.proj_b, dr_emb3,
              p.w1_img, p.w1_dr, p.b1, p.w2, p.b2)

    def full2d(arr):  # whole small weight resident in VMEM (constant index_map)
        return pl.BlockSpec(arr.shape, lambda b, t: (0, 0))

    # Deeper pipelining only on the one per-step streamed input (the reduction
    # is DMA-latency bound); skip it when the reduction is too short to matter.
    if n_tiles >= 3:
        patches_spec = pl.BlockSpec((1, tile_s, K), lambda b, t: (b, t, 0),
                                    pipeline_mode=pl.Buffered(3))
    else:
        patches_spec = pl.BlockSpec((1, tile_s, K), lambda b, t: (b, t, 0))

    flops = (2 * B * S_pad * K * Cs_pad              # stem matmul
             + 2 * B * S_pad * Cs_pad                # GAP ones-matmul
             + 2 * B * (Cs_pad * F_pad + F_pad * H + E * H + H * NC_pad))
    bytes_accessed = (sum(int(x.size) * x.dtype.itemsize for x in inputs)
                      + B * NC_pad * 4)

    out = pl.pallas_call(
        functools.partial(_fused_kernel, s_true=S, tile_s=tile_s),
        out_shape=jax.ShapeDtypeStruct((B, 1, NC_pad), jnp.float32),
        grid=(B, n_tiles),
        in_specs=[
            patches_spec,
            full2d(p.stem_w), full2d(p.stem_b),
            full2d(p.proj_w), full2d(p.proj_b),
            pl.BlockSpec((1, 1, E), lambda b, t: (b, 0, 0)),
            full2d(p.w1_img), full2d(p.w1_dr), full2d(p.b1),
            full2d(p.w2), full2d(p.b2),
        ],
        out_specs=pl.BlockSpec((1, 1, NC_pad), lambda b, t: (b, 0, 0)),
        scratch_shapes=[pltpu.VMEM((1, Cs_pad), jnp.float32)],
        compiler_params=pltpu.CompilerParams(
            # batch axis "parallel" -> both v7x TensorCores busy for B>=2;
            # spatial axis is the GAP reduction -> "arbitrary".
            dimension_semantics=("parallel", "arbitrary"),
            vmem_limit_bytes=32 * 1024 * 1024),
        cost_estimate=pl.CostEstimate(flops=flops, transcendentals=0,
                                      bytes_accessed=bytes_accessed),
    )(*inputs)
    return out[:, 0, :]                                              # (B, NC_pad)


# -----------------------------------------------------------------------------
# Glue: im2col (layout prep only; every matmul runs inside the Pallas kernel)
# -----------------------------------------------------------------------------
def im2col(x_nchw, k=3, stride=2, pad=1):
    # TODO(synk): avoid the im2col expansion entirely (biggest win on v5e) by
    #             accumulating k*k shifted tap matmuls on raw NHWC rows inside
    #             the kernel (memory_space=pl.ANY + make_async_copy).
    x = x_nchw.astype(jnp.bfloat16)     # halve the materialized patch bytes
    B, C, H, W = x.shape
    xp = jnp.pad(x, ((0, 0), (0, 0), (pad, pad), (pad, pad)))
    Ho = (H + 2 * pad - k) // stride + 1
    Wo = (W + 2 * pad - k) // stride + 1
    cols = []
    for i in range(k):
        for j in range(k):
            cols.append(xp[:, :, i:i + stride * Ho:stride, j:j + stride * Wo:stride])
    patches = jnp.stack(cols, axis=2)                     # (B, C, k*k, Ho, Wo)
    patches = patches.transpose(0, 3, 4, 1, 2)            # (B, Ho, Wo, C, k*k)
    patches = patches.reshape(B, Ho * Wo, C * k * k)      # (B, S, K) bf16
    return patches, Ho, Wo


# -----------------------------------------------------------------------------
# Parameters (lane-dense output dims; bf16 matmul weights, f32 biases; the
# im2col contraction dim K is NOT padded).
# -----------------------------------------------------------------------------
class MaxViTDMEParams:
    def __init__(self, key, in_ch=4, stem_ch=32, feature_dim=64,
                 num_dr_grade_classes=5, dr_embedding_dim=16,
                 num_dme_classes=2, hidden=256, k=3):
        ks = jax.random.split(key, 8)
        s = 0.05
        self.k = k
        self.num_dme_classes = num_dme_classes
        self.num_dr_grade_classes = num_dr_grade_classes

        K = in_ch * k * k                      # true contraction dim (no pad)
        Cs_pad = _round_up(stem_ch, 128)
        F_pad = _round_up(feature_dim, 128)
        NC_pad = _round_up(num_dme_classes, 128)

        def padded(w, shape_pad, dtype=jnp.bfloat16):
            buf = jnp.zeros(shape_pad, jnp.float32)
            return buf.at[:w.shape[0], :w.shape[1]].set(w).astype(dtype)

        stem_w = s * jax.random.normal(ks[0], (K, stem_ch), jnp.float32)
        stem_b = s * jax.random.normal(ks[1], (1, stem_ch), jnp.float32)
        proj_w = s * jax.random.normal(ks[2], (stem_ch, feature_dim), jnp.float32)
        proj_b = s * jax.random.normal(ks[3], (1, feature_dim), jnp.float32)
        w1_img = s * jax.random.normal(ks[5], (feature_dim, hidden), jnp.float32)
        w2 = s * jax.random.normal(ks[7], (hidden, num_dme_classes), jnp.float32)

        self.stem_w = padded(stem_w, (K, Cs_pad))                     # bf16
        self.stem_b = padded(stem_b, (1, Cs_pad), jnp.float32)
        self.proj_w = padded(proj_w, (Cs_pad, F_pad))                 # bf16
        self.proj_b = padded(proj_b, (1, F_pad), jnp.float32)
        self.emb_table = s * jax.random.normal(
            ks[4], (num_dr_grade_classes, dr_embedding_dim), jnp.float32)
        # fc[0]: Linear(fused_dim, 256), rows split into [image | embedding]
        self.w1_img = padded(w1_img, (F_pad, hidden))                 # bf16
        self.w1_dr = (s * jax.random.normal(
            ks[6], (dr_embedding_dim, hidden), jnp.float32)).astype(jnp.bfloat16)
        self.b1 = jnp.zeros((1, hidden), jnp.float32)
        # fc[2]: Linear(256, num_dme_classes)
        self.w2 = padded(w2, (hidden, NC_pad))                        # bf16
        self.b2 = jnp.zeros((1, NC_pad), jnp.float32)


def maxvit_dme_forward(params, image_nchw, dr_grade):
    # --- backbone stand-in (see TODO(synk) at top of file) ---
    patches, _, _ = im2col(image_nchw, k=params.k, stride=2, pad=1)
    # --- DME head: direct embedding row gather (== nn.Embedding lookup) ---
    dr_emb = params.emb_table[dr_grade].astype(jnp.bfloat16)         # (B, E)
    out_pad = fused_forward(patches, dr_emb, params)                 # (B, NC_pad)
    return out_pad[:, :params.num_dme_classes]


if __name__ == "__main__":
    key = jax.random.PRNGKey(0)
    k_param, k_img, k_grade = jax.random.split(key, 3)

    params = MaxViTDMEParams(k_param)

    # small synthetic inputs consistent with the module's forward signature
    image = jax.random.normal(k_img, (2, 4, 16, 16), jnp.float32)    # NCHW
    dr_grade = jax.random.randint(k_grade, (2,), 0, 5, jnp.int32)

    out = maxvit_dme_forward(params, image, dr_grade)
    out = jax.block_until_ready(out)
    assert out.shape == (2, 2) and out.dtype == jnp.float32
    print("KERNEL_OK")
</pallas_src>

<mosaic_0001>
module attributes {stable_mosaic.version = 11 : i64} {
  func.func @_fused_kernel(%arg0: i32, %arg1: i32, %arg2: memref<1x64x36xbf16, #tpu.memory_space<vmem>>, %arg3: memref<36x128xbf16, #tpu.memory_space<vmem>>, %arg4: memref<1x128xf32, #tpu.memory_space<vmem>>, %arg5: memref<128x128xbf16, #tpu.memory_space<vmem>>, %arg6: memref<1x128xf32, #tpu.memory_space<vmem>>, %arg7: memref<1x1x16xbf16, #tpu.memory_space<vmem>>, %arg8: memref<128x256xbf16, #tpu.memory_space<vmem>>, %arg9: memref<16x256xbf16, #tpu.memory_space<vmem>>, %arg10: memref<1x256xf32, #tpu.memory_space<vmem>>, %arg11: memref<256x128xbf16, #tpu.memory_space<vmem>>, %arg12: memref<1x128xf32, #tpu.memory_space<vmem>>, %arg13: memref<1x1x128xf32, #tpu.memory_space<vmem>>, %arg14: memref<1x128xf32, #tpu.memory_space<vmem>>) attributes {dimension_semantics = [#tpu.dimension_semantics<parallel>, #tpu.dimension_semantics<arbitrary>], iteration_bounds = array<i64: 2, 1>, scalar_prefetch = 0 : i64, scratch_operands = 1 : i64, tpu.core_type = #tpu.core_type<tc>, window_params = [{transform_indices = @transform_0, window_bounds = array<i64: 1, 64, 36>}, {pipeline_mode = #tpu.pipeline_mode<synchronous>, transform_indices = @transform_1, window_bounds = array<i64: 36, 128>}, {pipeline_mode = #tpu.pipeline_mode<synchronous>, transform_indices = @transform_2, window_bounds = array<i64: 1, 128>}, {pipeline_mode = #tpu.pipeline_mode<synchronous>, transform_indices = @transform_3, window_bounds = array<i64: 128, 128>}, {pipeline_mode = #tpu.pipeline_mode<synchronous>, transform_indices = @transform_4, window_bounds = array<i64: 1, 128>}, {transform_indices = @transform_5, window_bounds = array<i64: 1, 1, 16>}, {pipeline_mode = #tpu.pipeline_mode<synchronous>, transform_indices = @transform_6, window_bounds = array<i64: 128, 256>}, {pipeline_mode = #tpu.pipeline_mode<synchronous>, transform_indices = @transform_7, window_bounds = array<i64: 16, 256>}, {pipeline_mode = #tpu.pipeline_mode<synchronous>, transform_indices = @transform_8, window_bounds = array<i64: 1, 256>}, {pipeline_mode = #tpu.pipeline_mode<synchronous>, transform_indices = @transform_9, window_bounds = array<i64: 256, 128>}, {pipeline_mode = #tpu.pipeline_mode<synchronous>, transform_indices = @transform_10, window_bounds = array<i64: 1, 128>}, {transform_indices = @transform_11, window_bounds = array<i64: 1, 1, 128>}]} {
    %c0_i32 = arith.constant 0 : i32
    %0 = arith.cmpi eq, %arg1, %c0_i32 : i32
    %1 = arith.extui %0 : i1 to i32
    %c0_i32_0 = arith.constant 0 : i32
    %2 = arith.cmpi ne, %1, %c0_i32_0 : i32
    scf.if %2 {
      %cst_18 = arith.constant 0.000000e+00 : f32
      %28 = vector.broadcast %cst_18 : f32 to vector<1x128xf32>
      %c0_19 = arith.constant 0 : index
      %c0_20 = arith.constant 0 : index
      %29 = vector.load %arg14[%c0_19, %c0_20] : memref<1x128xf32, #tpu.memory_space<vmem>>, vector<1x128xf32>
      tpu.vector_store %arg14[%c0_19, %c0_20], %28 {strides = array<i32>} : memref<1x128xf32, #tpu.memory_space<vmem>>, vector<1x128xf32>,
    } else {
    }
    %c0 = arith.constant 0 : index
    %c0_1 = arith.constant 0 : index
    %c0_2 = arith.constant 0 : index
    %3 = vector.load %arg2[%c0, %c0_1, %c0_2] : memref<1x64x36xbf16, #tpu.memory_space<vmem>>, vector<1x64x36xbf16>
    %4 = vector.shape_cast %3 : vector<1x64x36xbf16> to vector<64x36xbf16>
    %c0_3 = arith.constant 0 : index
    %c0_4 = arith.constant 0 : index
    %5 = vector.load %arg3[%c0_3, %c0_4] : memref<36x128xbf16, #tpu.memory_space<vmem>>, vector<36x128xbf16>
    %cst = arith.constant dense<0.000000e+00> : vector<64x128xf32>
    %6 = tpu.matmul %4, %5, %cst {dimension_numbers = #tpu.dot_dimension_numbers<[1], [0], [0], [1], [0, 0, 1, 1], [], []>} : vector<64x36xbf16>, vector<36x128xbf16>, vector<64x128xf32> -> vector<64x128xf32>
    %c0_5 = arith.constant 0 : index
    %c0_6 = arith.constant 0 : index
    %7 = vector.load %arg4[%c0_5, %c0_6] : memref<1x128xf32, #tpu.memory_space<vmem>>, vector<1x128xf32>
    %8 = vector.broadcast %7 : vector<1x128xf32> to vector<64x128xf32>
    %9 = arith.addf %6, %8 : vector<64x128xf32>
    %cst_7 = arith.constant 0.000000e+00 : f32
    %10 = vector.broadcast %cst_7 : f32 to vector<64x128xf32>
    %11 = arith.maximumf %9, %10 : vector<64x128xf32>
    %c64_i32 = arith.constant 64 : i32
    %12 = arith.muli %arg1, %c64_i32 : i32
    %13 = tpu.iota {dimensions = array<i32: 1>} : vector<1x64xi32>
    %14 = vector.broadcast %12 : i32 to vector<1x64xi32>
    %15 = arith.addi %14, %13 : vector<1x64xi32>
    %c64_i32_8 = arith.constant 64 : i32
    %16 = vector.broadcast %c64_i32_8 : i32 to vector<1x64xi32>
    %17 = arith.cmpi slt, %15, %16 : vector<1x64xi32>
    %cst_9 = arith.constant 1.000000e+00 : f32
    %cst_10 = arith.constant 0.000000e+00 : f32
    %18 = vector.broadcast %cst_9 : f32 to vector<1x64xf32>
    %19 = vector.broadcast %cst_10 : f32 to vector<1x64xf32>
    %20 = arith.select %17, %18, %19 : vector<1x64xi1>, vector<1x64xf32>
    %c0_11 = arith.constant 0 : index
    %c0_12 = arith.constant 0 : index
    %21 = vector.load %arg14[%c0_11, %c0_12] : memref<1x128xf32, #tpu.memory_space<vmem>>, vector<1x128xf32>
    %cst_13 = arith.constant dense<0.000000e+00> : vector<1x128xf32>
    %22 = tpu.matmul %20, %11, %cst_13 {dimension_numbers = #tpu.dot_dimension_numbers<[1], [0], [0], [1], [0, 0, 1, 1], [], []>} : vector<1x64xf32>, vector<64x128xf32>, vector<1x128xf32> -> vector<1x128xf32>
    %23 = arith.addf %21, %22 : vector<1x128xf32>
    %c0_14 = arith.constant 0 : index
    %c0_15 = arith.constant 0 : index
    %24 = vector.load %arg14[%c0_14, %c0_15] : memref<1x128xf32, #tpu.memory_space<vmem>>, vector<1x128xf32>
    tpu.vector_store %arg14[%c0_14, %c0_15], %23 {strides = array<i32>} : memref<1x128xf32, #tpu.memory_space<vmem>>, vector<1x128xf32>,
    %c0_i32_16 = arith.constant 0 : i32
    %25 = arith.cmpi eq, %arg1, %c0_i32_16 : i32
    %26 = arith.extui %25 : i1 to i32
    %c0_i32_17 = arith.constant 0 : i32
    %27 = arith.cmpi ne, %26, %c0_i32_17 : i32
    scf.if %27 {
      %c0_18 = arith.constant 0 : index
      %c0_19 = arith.constant 0 : index
      %28 = vector.load %arg14[%c0_18, %c0_19] : memref<1x128xf32, #tpu.memory_space<vmem>>, vector<1x128xf32>
      %cst_20 = arith.constant 1.562500e-02 : f32
      %29 = vector.broadcast %cst_20 : f32 to vector<1x128xf32>
      %30 = arith.mulf %28, %29 : vector<1x128xf32>
      %31 = arith.truncf %30 : vector<1x128xf32> to vector<1x128xbf16>
      %c0_21 = arith.constant 0 : index
      %c0_22 = arith.constant 0 : index
      %32 = vector.load %arg5[%c0_21, %c0_22] : memref<128x128xbf16, #tpu.memory_space<vmem>>, vector<128x128xbf16>
      %cst_23 = arith.constant dense<0.000000e+00> : vector<1x128xf32>
      %33 = tpu.matmul %31, %32, %cst_23 {dimension_numbers = #tpu.dot_dimension_numbers<[1], [0], [0], [1], [0, 0, 1, 1], [], []>} : vector<1x128xbf16>, vector<128x128xbf16>, vector<1x128xf32> -> vector<1x128xf32>
      %c0_24 = arith.constant 0 : index
      %c0_25 = arith.constant 0 : index
      %34 = vector.load %arg6[%c0_24, %c0_25] : memref<1x128xf32, #tpu.memory_space<vmem>>, vector<1x128xf32>
      %35 = arith.addf %33, %34 : vector<1x128xf32>
      %c0_26 = arith.constant 0 : index
      %c0_27 = arith.constant 0 : index
      %c0_28 = arith.constant 0 : index
      %36 = vector.load %arg7[%c0_26, %c0_27, %c0_28] : memref<1x1x16xbf16, #tpu.memory_space<vmem>>, vector<1x1x16xbf16>
      %37 = vector.shape_cast %36 : vector<1x1x16xbf16> to vector<1x16xbf16>
      %38 = arith.truncf %35 : vector<1x128xf32> to vector<1x128xbf16>
      %c0_29 = arith.constant 0 : index
      %c0_30 = arith.constant 0 : index
      %39 = vector.load %arg8[%c0_29, %c0_30] : memref<128x256xbf16, #tpu.memory_space<vmem>>, vector<128x256xbf16>
      %cst_31 = arith.constant dense<0.000000e+00> : vector<1x256xf32>
      %40 = tpu.matmul %38, %39, %cst_31 {dimension_numbers = #tpu.dot_dimension_numbers<[1], [0], [0], [1], [0, 0, 1, 1], [], []>} : vector<1x128xbf16>, vector<128x256xbf16>, vector<1x256xf32> -> vector<1x256xf32>
      %c0_32 = arith.constant 0 : index
      %c0_33 = arith.constant 0 : index
      %41 = vector.load %arg9[%c0_32, %c0_33] : memref<16x256xbf16, #tpu.memory_space<vmem>>, vector<16x256xbf16>
      %cst_34 = arith.constant dense<0.000000e+00> : vector<1x256xf32>
      %42 = tpu.matmul %37, %41, %cst_34 {dimension_numbers = #tpu.dot_dimension_numbers<[1], [0], [0], [1], [0, 0, 1, 1], [], []>} : vector<1x16xbf16>, vector<16x256xbf16>, vector<1x256xf32> -> vector<1x256xf32>
      %43 = arith.addf %40, %42 : vector<1x256xf32>
      %c0_35 = arith.constant 0 : index
      %c0_36 = arith.constant 0 : index
      %44 = vector.load %arg10[%c0_35, %c0_36] : memref<1x256xf32, #tpu.memory_space<vmem>>, vector<1x256xf32>
      %45 = arith.addf %43, %44 : vector<1x256xf32>
      %cst_37 = arith.constant 0.000000e+00 : f32
      %46 = vector.broadcast %cst_37 : f32 to vector<1x256xf32>
      %47 = arith.maximumf %45, %46 : vector<1x256xf32>
      %48 = arith.truncf %47 : vector<1x256xf32> to vector<1x256xbf16>
      %c0_38 = arith.constant 0 : index
      %c0_39 = arith.constant 0 : index
      %49 = vector.load %arg11[%c0_38, %c0_39] : memref<256x128xbf16, #tpu.memory_space<vmem>>, vector<256x128xbf16>
      %cst_40 = arith.constant dense<0.000000e+00> : vector<1x128xf32>
      %50 = tpu.matmul %48, %49, %cst_40 {dimension_numbers = #tpu.dot_dimension_numbers<[1], [0], [0], [1], [0, 0, 1, 1], [], []>} : vector<1x256xbf16>, vector<256x128xbf16>, vector<1x128xf32> -> vector<1x128xf32>
      %c0_41 = arith.constant 0 : index
      %c0_42 = arith.constant 0 : index
      %51 = vector.load %arg12[%c0_41, %c0_42] : memref<1x128xf32, #tpu.memory_space<vmem>>, vector<1x128xf32>
      %52 = arith.addf %50, %51 : vector<1x128xf32>
      %c0_43 = arith.constant 0 : index
      %c0_44 = arith.constant 0 : index
      %c0_45 = arith.constant 0 : index
      %53 = vector.load %arg13[%c0_43, %c0_44, %c0_45] : memref<1x1x128xf32, #tpu.memory_space<vmem>>, vector<1x1x128xf32>
      %54 = vector.shape_cast %53 : vector<1x1x128xf32> to vector<1x128xf32>
      %55 = vector.shape_cast %52 : vector<1x128xf32> to vector<1x1x128xf32>
      tpu.vector_store %arg13[%c0_43, %c0_44, %c0_45], %55 {strides = array<i32>} : memref<1x1x128xf32, #tpu.memory_space<vmem>>, vector<1x1x128xf32>,
    } else {
    }
    return
  }
  func.func @transform_0(%arg0: i32, %arg1: i32) -> (i32, i32, i32) {
    %c0_i32 = arith.constant 0 : i32
    %c0_i32_0 = arith.constant 0 : i32
    return %arg0, %arg1, %c0_i32 : i32, i32, i32
  }
  func.func @transform_1(%arg0: i32, %arg1: i32) -> (i32, i32) {
    %c0_i32 = arith.constant 0 : i32
    %c0_i32_0 = arith.constant 0 : i32
    %c0_i32_1 = arith.constant 0 : i32
    return %c0_i32, %c0_i32_0 : i32, i32
  }
  func.func @transform_2(%arg0: i32, %arg1: i32) -> (i32, i32) {
    %c0_i32 = arith.constant 0 : i32
    %c0_i32_0 = arith.constant 0 : i32
    %c0_i32_1 = arith.constant 0 : i32
    return %c0_i32, %c0_i32_0 : i32, i32
  }
  func.func @transform_3(%arg0: i32, %arg1: i32) -> (i32, i32) {
    %c0_i32 = arith.constant 0 : i32
    %c0_i32_0 = arith.constant 0 : i32
    %c0_i32_1 = arith.constant 0 : i32
    return %c0_i32, %c0_i32_0 : i32, i32
  }
  func.func @transform_4(%arg0: i32, %arg1: i32) -> (i32, i32) {
    %c0_i32 = arith.constant 0 : i32
    %c0_i32_0 = arith.constant 0 : i32
    %c0_i32_1 = arith.constant 0 : i32
    return %c0_i32, %c0_i32_0 : i32, i32
  }
  func.func @transform_5(%arg0: i32, %arg1: i32) -> (i32, i32, i32) {
    %c0_i32 = arith.constant 0 : i32
    %c0_i32_0 = arith.constant 0 : i32
    %c0_i32_1 = arith.constant 0 : i32
    return %arg0, %c0_i32, %c0_i32_0 : i32, i32, i32
  }
  func.func @transform_6(%arg0: i32, %arg1: i32) -> (i32, i32) {
    %c0_i32 = arith.constant 0 : i32
    %c0_i32_0 = arith.constant 0 : i32
    %c0_i32_1 = arith.constant 0 : i32
    return %c0_i32, %c0_i32_0 : i32, i32
  }
  func.func @transform_7(%arg0: i32, %arg1: i32) -> (i32, i32) {
    %c0_i32 = arith.constant 0 : i32
    %c0_i32_0 = arith.constant 0 : i32
    %c0_i32_1 = arith.constant 0 : i32
    return %c0_i32, %c0_i32_0 : i32, i32
  }
  func.func @transform_8(%arg0: i32, %arg1: i32) -> (i32, i32) {
    %c0_i32 = arith.constant 0 : i32
    %c0_i32_0 = arith.constant 0 : i32
    %c0_i32_1 = arith.constant 0 : i32
    return %c0_i32, %c0_i32_0 : i32, i32
  }
  func.func @transform_9(%arg0: i32, %arg1: i32) -> (i32, i32) {
    %c0_i32 = arith.constant 0 : i32
    %c0_i32_0 = arith.constant 0 : i32
    %c0_i32_1 = arith.constant 0 : i32
    return %c0_i32, %c0_i32_0 : i32, i32
  }
  func.func @transform_10(%arg0: i32, %arg1: i32) -> (i32, i32) {
    %c0_i32 = arith.constant 0 : i32
    %c0_i32_0 = arith.constant 0 : i32
    %c0_i32_1 = arith.constant 0 : i32
    return %c0_i32, %c0_i32_0 : i32, i32
  }
  func.func @transform_11(%arg0: i32, %arg1: i32) -> (i32, i32, i32) {
    %c0_i32 = arith.constant 0 : i32
    %c0_i32_0 = arith.constant 0 : i32
    %c0_i32_1 = arith.constant 0 : i32
    return %arg0, %c0_i32, %c0_i32_0 : i32, i32, i32
  }
}

</mosaic_0001>

<llo_original>
// kernel: tpu_custom_call.1
$region0: #{tpu_custom_call.1}
  #allocation0 [shape = 'u32[]', space=smem, size = 0x4, offset = 0x4, fixed_abs, tag = 'smem constant byte address 0x4 - core index']
  #allocation1 [shape = 'u32[144,128]{1,0:T(1,128)}', space=vmem, size = 0x12000, scoped, tag = 'internal scratch']
  #allocation2 [shape = 'f32[1,128]{1,0:T(1,128)}', space=vmem, size = 0x200, scoped, tag = 'scratch operand']
  %s0 = inlined_call_operand.vmem [shape: bf16[2,64,36], index: 0, kind: input, shape index: {}]
  %s1 = inlined_call_operand.hbm [shape: bf16[36,128], index: 1, kind: input, shape index: {}]
  %s2 = inlined_call_operand.vmem [shape: f32[1,128], index: 2, kind: input, shape index: {}]
  %s3 = inlined_call_operand.hbm [shape: bf16[128,128], index: 3, kind: input, shape index: {}]
  %s4 = inlined_call_operand.vmem [shape: f32[1,128], index: 4, kind: input, shape index: {}]
  %s5 = inlined_call_operand.vmem [shape: bf16[2,1,16], index: 5, kind: input, shape index: {}]
  %s6 = inlined_call_operand.hbm [shape: bf16[128,256], index: 6, kind: input, shape index: {}]
  %s7 = inlined_call_operand.hbm [shape: bf16[16,256], index: 7, kind: input, shape index: {}]
  %s8 = inlined_call_operand.vmem [shape: f32[1,256], index: 8, kind: input, shape index: {}]
  %s9 = inlined_call_operand.vmem [shape: bf16[256,128], index: 9, kind: input, shape index: {}]
  %s10 = inlined_call_operand.vmem [shape: f32[1,128], index: 10, kind: input, shape index: {}]
  %s11 = inlined_call_operand.hbm [shape: f32[2,1,128], index: 11, kind: output, shape index: {}]
  %s12 = sld [smem:[#allocation0]]
  $region101: #{tpu_custom_call.1} parent=0
    _
  %s14 = ssub.s32 1, %s12
  %s15 = scalar_select 0, %s14, %s12
  $region1: #{tpu_custom_call.1} parent=0
    #allocation3 [shape = 'u8[10240]{0}', space=vmem, size = 0x2800, scoped, tag = 'input window, operand 1, single buffered']
    #allocation4 [shape = 's32[2]{0}', space=sflag, size = 0x8, scoped, tag = 'scoped memory for tpu_custom_call.1']
    #allocation5 [shape = 's32[2]{0}', space=sflag, size = 0x8, scoped, tag = 'scoped memory for tpu_custom_call.1']
    #allocation6 [shape = 'u8[32768]{0}', space=vmem, size = 0x8000, scoped, tag = 'input window, operand 3, single buffered']
    #allocation7 [shape = 's32[1]{0}', space=sflag, size = 0x4, scoped, tag = 'scoped memory for tpu_custom_call.1']
    #allocation8 [shape = 'u8[65536]{0}', space=vmem, size = 0x10000, scoped, tag = 'input window, operand 6, single buffered']
    #allocation9 [shape = 'u8[8192]{0}', space=vmem, size = 0x2000, scoped, tag = 'input window, operand 7, single buffered']
    #allocation10 [shape = 's32[1]{0}', space=sflag, size = 0x4, scoped, tag = 'scoped memory for tpu_custom_call.1']
    #allocation11 [shape = 'u8[1024]{0}', space=vmem, size = 0x400, scoped, tag = 'output window, operand 0']
    %16 = vsyncpa [#allocation4], 0
    %17 = vsyncpa [#allocation7], 0
    %18 = vsyncpa [#allocation10], 0
    %19 = vsyncpa [#allocation5], 0
    %s20 = scalar_lea.sflag [#allocation5], 1
    %21 = vsyncpa %s20, 0
    loop: start=0, step=1, limit=4
    $region2: #{tpu_custom_call.1} parent=1 // loop_pre_header
      _
    $region3: #{tpu_custom_call.1} parent=1 // loop_header
      %s23 = sphi 0, %s27
      %p24 = scmp.ge.s32.totalorder %s23, 4
      %s30 = sphi 0, %s42
      %s31 = sphi 0, %s38
      %s32 = sphi 0, %s30
      %s33 = sphi 0, %s31
      %s34 = sphi 0, %s32
      %s35 = sphi 0, %s33
      %s47 = sphi 0, %s49
      %s50 = sphi 0, %s47
      %s51 = sphi 0, %s50
      %s67 = sphi 0, %s51
      %s71 = sphi 0, %s71
      %s73 = sphi 0, %s71
      %s74 = sphi 0, %s73
      %s88 = sphi 0, %s74
      %s92 = sphi 0, %s92
      %s94 = sphi 0, %s92
      %s95 = sphi 0, %s94
      %s109 = sphi 0, %s95
      %s113 = sphi 0, %s113
      %s115 = sphi 0, %s113
      %s116 = sphi 0, %s115
      %s130 = sphi 0, %s116
      %s134 = sphi 0, %s134
      %s136 = sphi 0, %s134
      %s137 = sphi 0, %s136
      %s151 = sphi 0, %s137
      %s157 = sphi 0, %s159
      %s160 = sphi 0, %s157
      %s161 = sphi 0, %s160
      %s177 = sphi 0, %s161
      %s181 = sphi 0, %s181
      %s183 = sphi 0, %s181
      %s184 = sphi 0, %s183
      %s198 = sphi 0, %s184
      %s202 = sphi 0, %s202
      %s204 = sphi 0, %s202
      %s205 = sphi 0, %s204
      %s219 = sphi 0, %s205
      %s223 = sphi 0, %s223
      %s225 = sphi 0, %s223
      %s226 = sphi 0, %s225
      %s240 = sphi 0, %s226
      %s244 = sphi 0, %s244
      %s246 = sphi 0, %s244
      %s247 = sphi 0, %s246
      %s261 = sphi 0, %s247
      %s265 = sphi 0, %s265
      %s267 = sphi 0, %s265
      %s268 = sphi 0, %s267
      %s282 = sphi 0, %s268
      %s288 = sphi 0, %s290
      %s291 = sphi 0, %s288
      %s292 = sphi 0, %s291
      %s308 = sphi 0, %s292
    $region4: #{tpu_custom_call.1} parent=1 // loop_header_branch
      %26 = sbr.rel (%p24) target = $region8
    $region5: #{tpu_custom_call.1} parent=1 // loop_body
      %s28 = ssub.s32 %s23, 1
      %s29 = ssub.s32 %s23, 2
      %s36 = sadd.s32 1, %s31
      %p37 = scmp.ge.s32.totalorder %s36, 1
      %s38 = scalar_select %p37, 0, %s36
      %s39 = sadd.s32 1, %s30
      %s40 = scalar_select %p37, %s39, %s30
      %p41 = scmp.ge.s32.totalorder %s40, 2
      %s42 = scalar_select %p41, 0, %s40
      %s43 = ssub.s32 %s30, %s42
      %s44 = ssub.s32 %s31, %s38
      %s45 = sor.u32 %s43, %s44
      %p46 = scmp.eq.s32.totalorder %s45, 0
      %s48 = sadd.s32 %s47, 1
      %s49 = scalar_select %p46, %s47, %s48
      %p52 = pneg %p46
      %p53 = scmp.eq.s32.totalorder %s23, 1
      %p54 = por %p52, %p53
      %p55 = scmp.ne.s32.totalorder %s47, %s50
      %p56 = scmp.eq.s32.totalorder %s23, 0
      %p57 = por %p55, %p56
      %p58 = scmp.ne.s32.totalorder %s47, %s50
      %p59 = scmp.eq.s32.totalorder %s28, 1
      %p60 = por %p58, %p59
      %p61 = scmp.ne.s32.totalorder %s50, %s51
      %p62 = scmp.eq.s32.totalorder %s28, 0
      %p63 = por %p61, %p62
      %p64 = scmp.ne.s32.totalorder %s50, %s51
      %p65 = scmp.eq.s32.totalorder %s29, 1
      %p66 = por %p64, %p65
      %p68 = scmp.ne.s32.totalorder %s51, %s67
      %p69 = scmp.eq.s32.totalorder %s29, 0
      %p70 = por %p68, %p69
      %s72 = sadd.s32 %s71, 1
      %p75 = scmp.eq.s32.totalorder %s23, 1
      %p76 = scmp.ne.s32.totalorder %s71, %s73
      %p77 = scmp.eq.s32.totalorder %s23, 0
      %p78 = por %p76, %p77
      %p79 = scmp.ne.s32.totalorder %s71, %s73
      %p80 = scmp.eq.s32.totalorder %s28, 1
      %p81 = por %p79, %p80
      %p82 = scmp.ne.s32.totalorder %s73, %s74
      %p83 = scmp.eq.s32.totalorder %s28, 0
      %p84 = por %p82, %p83
      %p85 = scmp.ne.s32.totalorder %s73, %s74
      %p86 = scmp.eq.s32.totalorder %s29, 1
      %p87 = por %p85, %p86
      %p89 = scmp.ne.s32.totalorder %s74, %s88
      %p90 = scmp.eq.s32.totalorder %s29, 0
      %p91 = por %p89, %p90
      %s93 = sadd.s32 %s92, 1
      %p96 = scmp.eq.s32.totalorder %s23, 1
      %p97 = scmp.ne.s32.totalorder %s92, %s94
      %p98 = scmp.eq.s32.totalorder %s23, 0
      %p99 = por %p97, %p98
      %p100 = scmp.ne.s32.totalorder %s92, %s94
      %p101 = scmp.eq.s32.totalorder %s28, 1
      %p102 = por %p100, %p101
      %p103 = scmp.ne.s32.totalorder %s94, %s95
      %p104 = scmp.eq.s32.totalorder %s28, 0
      %p105 = por %p103, %p104
      %p106 = scmp.ne.s32.totalorder %s94, %s95
      %p107 = scmp.eq.s32.totalorder %s29, 1
      %p108 = por %p106, %p107
      %p110 = scmp.ne.s32.totalorder %s95, %s109
      %p111 = scmp.eq.s32.totalorder %s29, 0
      %p112 = por %p110, %p111
      %s114 = sadd.s32 %s113, 1
      %p117 = scmp.eq.s32.totalorder %s23, 1
      %p118 = scmp.ne.s32.totalorder %s113, %s115
      %p119 = scmp.eq.s32.totalorder %s23, 0
      %p120 = por %p118, %p119
      %p121 = scmp.ne.s32.totalorder %s113, %s115
      %p122 = scmp.eq.s32.totalorder %s28, 1
      %p123 = por %p121, %p122
      %p124 = scmp.ne.s32.totalorder %s115, %s116
      %p125 = scmp.eq.s32.totalorder %s28, 0
      %p126 = por %p124, %p125
      %p127 = scmp.ne.s32.totalorder %s115, %s116
      %p128 = scmp.eq.s32.totalorder %s29, 1
      %p129 = por %p127, %p128
      %p131 = scmp.ne.s32.totalorder %s116, %s130
      %p132 = scmp.eq.s32.totalorder %s29, 0
      %p133 = por %p131, %p132
      %s135 = sadd.s32 %s134, 1
      %p138 = scmp.eq.s32.totalorder %s23, 1
      %p139 = scmp.ne.s32.totalorder %s134, %s136
      %p140 = scmp.eq.s32.totalorder %s23, 0
      %p141 = por %p139, %p140
      %p142 = scmp.ne.s32.totalorder %s134, %s136
      %p143 = scmp.eq.s32.totalorder %s28, 1
      %p144 = por %p142, %p143
      %p145 = scmp.ne.s32.totalorder %s136, %s137
      %p146 = scmp.eq.s32.totalorder %s28, 0
      %p147 = por %p145, %p146
      %p148 = scmp.ne.s32.totalorder %s136, %s137
      %p149 = scmp.eq.s32.totalorder %s29, 1
      %p150 = por %p148, %p149
      %p152 = scmp.ne.s32.totalorder %s137, %s151
      %p153 = scmp.eq.s32.totalorder %s29, 0
      %p154 = por %p152, %p153
      %s155 = ssub.s32 %s30, %s42
      %p156 = scmp.eq.s32.totalorder %s155, 0
      %s158 = sadd.s32 %s157, 1
      %s159 = scalar_select %p156, %s157, %s158
      %p162 = pneg %p156
      %p163 = scmp.eq.s32.totalorder %s23, 1
      %p164 = por %p162, %p163
      %p165 = scmp.ne.s32.totalorder %s157, %s160
      %p166 = scmp.eq.s32.totalorder %s23, 0
      %p167 = por %p165, %p166
      %p168 = scmp.ne.s32.totalorder %s157, %s160
      %p169 = scmp.eq.s32.totalorder %s28, 1
      %p170 = por %p168, %p169
      %p171 = scmp.ne.s32.totalorder %s160, %s161
      %p172 = scmp.eq.s32.totalorder %s28, 0
      %p173 = por %p171, %p172
      %p174 = scmp.ne.s32.totalorder %s160, %s161
      %p175 = scmp.eq.s32.totalorder %s29, 1
      %p176 = por %p174, %p175
      %p178 = scmp.ne.s32.totalorder %s161, %s177
      %p179 = scmp.eq.s32.totalorder %s29, 0
      %p180 = por %p178, %p179
      %s182 = sadd.s32 %s181, 1
      %p185 = scmp.eq.s32.totalorder %s23, 1
      %p186 = scmp.ne.s32.totalorder %s181, %s183
      %p187 = scmp.eq.s32.totalorder %s23, 0
      %p188 = por %p186, %p187
      %p189 = scmp.ne.s32.totalorder %s181, %s183
      %p190 = scmp.eq.s32.totalorder %s28, 1
      %p191 = por %p189, %p190
      %p192 = scmp.ne.s32.totalorder %s183, %s184
      %p193 = scmp.eq.s32.totalorder %s28, 0
      %p194 = por %p192, %p193
      %p195 = scmp.ne.s32.totalorder %s183, %s184
      %p196 = scmp.eq.s32.totalorder %s29, 1
      %p197 = por %p195, %p196
      %p199 = scmp.ne.s32.totalorder %s184, %s198
      %p200 = scmp.eq.s32.totalorder %s29, 0
      %p201 = por %p199, %p200
      %s203 = sadd.s32 %s202, 1
      %p206 = scmp.eq.s32.totalorder %s23, 1
      %p207 = scmp.ne.s32.totalorder %s202, %s204
      %p208 = scmp.eq.s32.totalorder %s23, 0
      %p209 = por %p207, %p208
      %p210 = scmp.ne.s32.totalorder %s202, %s204
      %p211 = scmp.eq.s32.totalorder %s28, 1
      %p212 = por %p210, %p211
      %p213 = scmp.ne.s32.totalorder %s204, %s205
      %p214 = scmp.eq.s32.totalorder %s28, 0
      %p215 = por %p213, %p214
      %p216 = scmp.ne.s32.totalorder %s204, %s205
      %p217 = scmp.eq.s32.totalorder %s29, 1
      %p218 = por %p216, %p217
      %p220 = scmp.ne.s32.totalorder %s205, %s219
      %p221 = scmp.eq.s32.totalorder %s29, 0
      %p222 = por %p220, %p221
      %s224 = sadd.s32 %s223, 1
      %p227 = scmp.eq.s32.totalorder %s23, 1
      %p228 = scmp.ne.s32.totalorder %s223, %s225
      %p229 = scmp.eq.s32.totalorder %s23, 0
      %p230 = por %p228, %p229
      %p231 = scmp.ne.s32.totalorder %s223, %s225
      %p232 = scmp.eq.s32.totalorder %s28, 1
      %p233 = por %p231, %p232
      %p234 = scmp.ne.s32.totalorder %s225, %s226
      %p235 = scmp.eq.s32.totalorder %s28, 0
      %p236 = por %p234, %p235
      %p237 = scmp.ne.s32.totalorder %s225, %s226
      %p238 = scmp.eq.s32.totalorder %s29, 1
      %p239 = por %p237, %p238
      %p241 = scmp.ne.s32.totalorder %s226, %s240
      %p242 = scmp.eq.s32.totalorder %s29, 0
      %p243 = por %p241, %p242
      %s245 = sadd.s32 %s244, 1
      %p248 = scmp.eq.s32.totalorder %s23, 1
      %p249 = scmp.ne.s32.totalorder %s244, %s246
      %p250 = scmp.eq.s32.totalorder %s23, 0
      %p251 = por %p249, %p250
      %p252 = scmp.ne.s32.totalorder %s244, %s246
      %p253 = scmp.eq.s32.totalorder %s28, 1
      %p254 = por %p252, %p253
      %p255 = scmp.ne.s32.totalorder %s246, %s247
      %p256 = scmp.eq.s32.totalorder %s28, 0
      %p257 = por %p255, %p256
      %p258 = scmp.ne.s32.totalorder %s246, %s247
      %p259 = scmp.eq.s32.totalorder %s29, 1
      %p260 = por %p258, %p259
      %p262 = scmp.ne.s32.totalorder %s247, %s261
      %p263 = scmp.eq.s32.totalorder %s29, 0
      %p264 = por %p262, %p263
      %s266 = sadd.s32 %s265, 1
      %p269 = scmp.eq.s32.totalorder %s23, 1
      %p270 = scmp.ne.s32.totalorder %s265, %s267
      %p271 = scmp.eq.s32.totalorder %s23, 0
      %p272 = por %p270, %p271
      %p273 = scmp.ne.s32.totalorder %s265, %s267
      %p274 = scmp.eq.s32.totalorder %s28, 1
      %p275 = por %p273, %p274
      %p276 = scmp.ne.s32.totalorder %s267, %s268
      %p277 = scmp.eq.s32.totalorder %s28, 0
      %p278 = por %p276, %p277
      %p279 = scmp.ne.s32.totalorder %s267, %s268
      %p280 = scmp.eq.s32.totalorder %s29, 1
      %p281 = por %p279, %p280
      %p283 = scmp.ne.s32.totalorder %s268, %s282
      %p284 = scmp.eq.s32.totalorder %s29, 0
      %p285 = por %p283, %p284
      %s286 = ssub.s32 %s30, %s42
      %p287 = scmp.eq.s32.totalorder %s286, 0
      %s289 = sadd.s32 %s288, 1
      %s290 = scalar_select %p287, %s288, %s289
      %p293 = pneg %p287
      %p294 = scmp.eq.s32.totalorder %s23, 1
      %p295 = por %p293, %p294
      %p296 = scmp.ne.s32.totalorder %s288, %s291
      %p297 = scmp.eq.s32.totalorder %s23, 0
      %p298 = por %p296, %p297
      %p299 = scmp.ne.s32.totalorder %s288, %s291
      %p300 = scmp.eq.s32.totalorder %s28, 1
      %p301 = por %p299, %p300
      %p302 = scmp.ne.s32.totalorder %s291, %s292
      %p303 = scmp.eq.s32.totalorder %s28, 0
      %p304 = por %p302, %p303
      %p305 = scmp.ne.s32.totalorder %s291, %s292
      %p306 = scmp.eq.s32.totalorder %s29, 1
      %p307 = por %p305, %p306
      %p309 = scmp.ne.s32.totalorder %s292, %s308
      %p310 = scmp.eq.s32.totalorder %s29, 0
      %p311 = por %p309, %p310
      %p312 = scmp.le.s32.totalorder 1, %s23
      %p313 = scmp.lt.s32.totalorder %s23, 3
      %p314 = pnand %p312, %p313
      %p315 = pneg %p314
      // Predicated region
      $region9: #{tpu_custom_call.1} parent=5 // pred_check
        _
      $region10: #{tpu_custom_call.1} parent=5 // pred_check_branch
        %317 = sbr.rel (%p314) target = $region12
      $region11: #{tpu_custom_call.1} parent=5 // pred_region
        %s318 = ssub.s32 %s23, 1
        // Predicated region
        $region13: #{tpu_custom_call.1} parent=11 // pred_check
          %p319 = pneg %p84
        $region14: #{tpu_custom_call.1} parent=11 // pred_check_branch
          %321 = sbr.rel (%p319) target = $region16
        $region15: #{tpu_custom_call.1} parent=11 // pred_region
          %s323 = ssub.s32 320, 320
          %324 = vsyncadd [#allocation4], %s323
          %s325 = sshll.u32 [#allocation3], 4
          %s326 = int_to_ptr.vmem [resolvable:$true] %s325
          %331 = dma.hbm_to_vmem [thread:$0]  %s1, 320, %s326, [#allocation4], 64, 64, 4
        $region16: #{tpu_custom_call.1} parent=11 // pred_fallthru
          _
        // Predicated region
        $region17: #{tpu_custom_call.1} parent=11 // pred_check
          %p332 = pneg %p105
        $region18: #{tpu_custom_call.1} parent=11 // pred_check_branch
          %334 = sbr.rel (%p332) target = $region20
        $region19: #{tpu_custom_call.1} parent=11 // pred_region
          _
        $region20: #{tpu_custom_call.1} parent=11 // pred_fallthru
          _
        // Predicated region
        $region21: #{tpu_custom_call.1} parent=11 // pred_check
          %p335 = pneg %p126
        $region22: #{tpu_custom_call.1} parent=11 // pred_check_branch
          %337 = sbr.rel (%p335) target = $region24
        $region23: #{tpu_custom_call.1} parent=11 // pred_region
          %s339 = ssub.s32 1024, 1024
          %340 = vsyncadd [#allocation7], %s339
          %s341 = sshll.u32 [#allocation6], 4
          %s342 = int_to_ptr.vmem [resolvable:$true] %s341
          %347 = dma.hbm_to_vmem [thread:$0]  %s3, 1024, %s342, [#allocation7], 64, 64, 4
        $region24: #{tpu_custom_call.1} parent=11 // pred_fallthru
          _
        // Predicated region
        $region25: #{tpu_custom_call.1} parent=11 // pred_check
          %p348 = pneg %p147
        $region26: #{tpu_custom_call.1} parent=11 // pred_check_branch
          %350 = sbr.rel (%p348) target = $region28
        $region27: #{tpu_custom_call.1} parent=11 // pred_region
          _
        $region28: #{tpu_custom_call.1} parent=11 // pred_fallthru
          _
        // Predicated region
        $region29: #{tpu_custom_call.1} parent=11 // pred_check
          %p351 = pneg %p194
        $region30: #{tpu_custom_call.1} parent=11 // pred_check_branch
          %353 = sbr.rel (%p351) target = $region32
        $region31: #{tpu_custom_call.1} parent=11 // pred_region
          %s355 = ssub.s32 2048, 2048
          %356 = vsyncadd [#allocation7], %s355
          %s357 = sshll.u32 [#allocation8], 4
          %s358 = int_to_ptr.vmem [resolvable:$true] %s357
          %363 = dma.hbm_to_vmem [thread:$0]  %s6, 2048, %s358, [#allocation7], 128, 128, 8
        $region32: #{tpu_custom_call.1} parent=11 // pred_fallthru
          _
        // Predicated region
        $region33: #{tpu_custom_call.1} parent=11 // pred_check
          %p364 = pneg %p215
        $region34: #{tpu_custom_call.1} parent=11 // pred_check_branch
          %366 = sbr.rel (%p364) target = $region36
        $region35: #{tpu_custom_call.1} parent=11 // pred_region
          %s368 = ssub.s32 256, 256
          %369 = vsyncadd [#allocation10], %s368
          %s370 = sshll.u32 [#allocation9], 4
          %s371 = int_to_ptr.vmem [resolvable:$true] %s370
          %376 = dma.hbm_to_vmem [thread:$0]  %s7, 256, %s371, [#allocation10], 128, 128, 8
        $region36: #{tpu_custom_call.1} parent=11 // pred_fallthru
          _
        // Predicated region
        $region37: #{tpu_custom_call.1} parent=11 // pred_check
          %p377 = pneg %p236
        $region38: #{tpu_custom_call.1} parent=11 // pred_check_branch
          %379 = sbr.rel (%p377) target = $region40
        $region39: #{tpu_custom_call.1} parent=11 // pred_region
          _
        $region40: #{tpu_custom_call.1} parent=11 // pred_fallthru
          _
        // Predicated region
        $region41: #{tpu_custom_call.1} parent=11 // pred_check
          %p380 = pneg %p257
        $region42: #{tpu_custom_call.1} parent=11 // pred_check_branch
          %382 = sbr.rel (%p380) target = $region44
        $region43: #{tpu_custom_call.1} parent=11 // pred_region
          _
        $region44: #{tpu_custom_call.1} parent=11 // pred_fallthru
          _
        // Predicated region
        $region45: #{tpu_custom_call.1} parent=11 // pred_check
          %p383 = pneg %p278
        $region46: #{tpu_custom_call.1} parent=11 // pred_check_branch
          %385 = sbr.rel (%p383) target = $region48
        $region47: #{tpu_custom_call.1} parent=11 // pred_region
          _
        $region48: #{tpu_custom_call.1} parent=11 // pred_fallthru
          _
      $region12: #{tpu_custom_call.1} parent=5 // pred_fallthru
        _
      %p386 = scmp.lt.s32.totalorder %s23, 2
      // Predicated region
      $region49: #{tpu_custom_call.1} parent=5 // pred_check
        %p387 = pneg %p386
      $region50: #{tpu_custom_call.1} parent=5 // pred_check_branch
        %389 = sbr.rel (%p387) target = $region52
      $region51: #{tpu_custom_call.1} parent=5 // pred_region
        // Predicated region
        $region53: #{tpu_custom_call.1} parent=51 // pred_check
          %p390 = pneg %p57
        $region54: #{tpu_custom_call.1} parent=51 // pred_check_branch
          %392 = sbr.rel (%p390) target = $region56
        $region55: #{tpu_custom_call.1} parent=51 // pred_region
          %s393 = smul.u32 8, %s31
          %p394 = scmp.lt.s32.totalorder %s30, 1
          %s395 = scalar_select %p394, %s30, 1
          %p396 = scmp.lt.s32.totalorder %s393, 7
          %s397 = scalar_select %p396, %s393, 7
          %s398 = smul.addr %s395, 8
          %s399 = sadd.s32 %s397, %s398
          %s400 = smul.addr %s399, 4
          %s401 = scalar_lea.vmem %s0, %s400
          %s402 = smul.u32 8, %s31
        $region56: #{tpu_custom_call.1} parent=51 // pred_fallthru
          _
        // Predicated region
        $region57: #{tpu_custom_call.1} parent=51 // pred_check
          %p403 = pneg %p167
        $region58: #{tpu_custom_call.1} parent=51 // pred_check_branch
          %405 = sbr.rel (%p403) target = $region60
        $region59: #{tpu_custom_call.1} parent=51 // pred_region
          %p406 = scmp.lt.s32.totalorder %s30, 1
          %s407 = scalar_select %p406, %s30, 1
          %s408 = scalar_lea.vmem %s5, %s407
        $region60: #{tpu_custom_call.1} parent=51 // pred_fallthru
          _
      $region52: #{tpu_custom_call.1} parent=5 // pred_fallthru
        _
      %p409 = scmp.le.s32.totalorder 1, %s23
      %p410 = scmp.lt.s32.totalorder %s23, 3
      %p411 = pnand %p409, %p410
      %p412 = pneg %p411
      // Predicated region
      $region61: #{tpu_custom_call.1} parent=5 // pred_check
        _
      $region62: #{tpu_custom_call.1} parent=5 // pred_check_branch
        %414 = sbr.rel (%p411) target = $region64
      $region63: #{tpu_custom_call.1} parent=5 // pred_region
        %s415 = ssub.s32 %s23, 1
        // Predicated region
        $region65: #{tpu_custom_call.1} parent=63 // pred_check
          %p416 = pneg %p84
        $region66: #{tpu_custom_call.1} parent=63 // pred_check_branch
          %418 = sbr.rel (%p416) target = $region68
        $region67: #{tpu_custom_call.1} parent=63 // pred_region
          %419 = dma.done [#allocation4], 320
        $region68: #{tpu_custom_call.1} parent=63 // pred_fallthru
          _
        // Predicated region
        $region69: #{tpu_custom_call.1} parent=63 // pred_check
          %p420 = pneg %p126
        $region70: #{tpu_custom_call.1} parent=63 // pred_check_branch
          %422 = sbr.rel (%p420) target = $region72
        $region71: #{tpu_custom_call.1} parent=63 // pred_region
          %423 = dma.done [#allocation7], 1024
        $region72: #{tpu_custom_call.1} parent=63 // pred_fallthru
          _
        // Predicated region
        $region73: #{tpu_custom_call.1} parent=63 // pred_check
          %p424 = pneg %p194
        $region74: #{tpu_custom_call.1} parent=63 // pred_check_branch
          %426 = sbr.rel (%p424) target = $region76
        $region75: #{tpu_custom_call.1} parent=63 // pred_region
          %427 = dma.done [#allocation7], 2048
        $region76: #{tpu_custom_call.1} parent=63 // pred_fallthru
          _
        // Predicated region
        $region77: #{tpu_custom_call.1} parent=63 // pred_check
          %p428 = pneg %p215
        $region78: #{tpu_custom_call.1} parent=63 // pred_check_branch
          %430 = sbr.rel (%p428) target = $region80
        $region79: #{tpu_custom_call.1} parent=63 // pred_region
          %431 = dma.done [#allocation10], 256
        $region80: #{tpu_custom_call.1} parent=63 // pred_fallthru
          _
        %s432 = smul.u32 8, %s33
        %p433 = scmp.lt.s32.totalorder %s32, 1
        %s434 = scalar_select %p433, %s32, 1
        %p435 = scmp.lt.s32.totalorder %s432, 7
        %s436 = scalar_select %p435, %s432, 7
        %s437 = smul.addr %s434, 8
        %s438 = sadd.s32 %s436, %s437
        %s439 = smul.addr %s438, 4
        %s440 = scalar_lea.vmem %s0, %s439
        %p441 = pneg %p63
        %p442 = pneg %p60
        %p443 = pneg %p84
        %p444 = pneg %p81
        %p445 = pneg %p105
        %p446 = pneg %p102
        %p447 = pneg %p126
        %p448 = pneg %p123
        %p449 = pneg %p147
        %p450 = pneg %p144
        %p451 = scmp.lt.s32.totalorder %s32, 1
        %s452 = scalar_select %p451, %s32, 1
        %s453 = scalar_lea.vmem %s5, %s452
        %p454 = pneg %p173
        %p455 = pneg %p170
        %p456 = pneg %p194
        %p457 = pneg %p191
        %p458 = pneg %p215
        %p459 = pneg %p212
        %p460 = pneg %p236
        %p461 = pneg %p233
        %p462 = pneg %p257
        %p463 = pneg %p254
        %p464 = pneg %p278
        %p465 = pneg %p275
        %p466 = pneg %p304
        %p467 = pneg %p301
        %s468 = sand.u32 %s291, 1
        %s469 = scalar_lea.sflag [#allocation5], %s468
        %s470 = sand.u32 %s291, 1
        %s471 = scalar_lea.vmem [#allocation11], %s470
        %s472 = smul.u32 8, %s33
        %p473 = scmp.lt.s32.totalorder %s32, 1
        %s474 = scalar_select %p473, %s32, 1
        %p475 = scmp.lt.s32.totalorder %s472, 7
        %s476 = scalar_select %p475, %s472, 7
        %s477 = smul.addr %s474, 8
        %s478 = sadd.s32 %s476, %s477
        %s479 = smul.addr %s478, 4
        %s480 = scalar_lea.vmem %s0, %s479
        %s481 = smul.u32 8, %s33
        %p482 = scmp.lt.s32.totalorder %s32, 1
        %s483 = scalar_select %p482, %s32, 1
        %s484 = scalar_lea.vmem %s5, %s483
        %p486 = scmp.eq.s32.totalorder %s33, 0
        // Predicated region
        $region81: #{tpu_custom_call.1} parent=63 // pred_check
          %p487 = pneg %p486
        $region82: #{tpu_custom_call.1} parent=63 // pred_check_branch
          %489 = sbr.rel (%p487) target = $region84
        $region83: #{tpu_custom_call.1} parent=63 // pred_region
          %490 = vst [vmem:[#allocation2] sm:$0x1] 0.0
        $region84: #{tpu_custom_call.1} parent=63 // pred_fallthru
          _
        %v491 = vld [vmem:[%s480] sm:$0xf]
        %v492 = vld [vmem:[%s480 + $0x4] sm:$0xf]
        %v493 = vld [vmem:[%s480 + $0x8] sm:$0xf]
        %v494 = vld [vmem:[%s480 + $0xc] sm:$0xf]
        %v495 = vld [vmem:[%s480 + $0x10] sm:$0xf]
        %v496 = vld [vmem:[%s480 + $0x14] sm:$0xf]
        %v497 = vld [vmem:[%s480 + $0x18] sm:$0xf]
        %v498 = vld [vmem:[%s480 + $0x1c] sm:$0xf]
        %v499 = vld [vmem:[#allocation3] sm:$0xf]
        %v500 = vld [vmem:[#allocation3 + $0x4] sm:$0xf]
        %v501 = vld [vmem:[#allocation3 + $0x8] sm:$0xf]
        %v502 = vld [vmem:[#allocation3 + $0xc] sm:$0xf]
        %v503 = vld [vmem:[#allocation3 + $0x10] sm:$0x3]
        %v504 = vld [vmem:[%s2] sm:$0x1]
        %v506 = vlaneseq
        %v507 = vshrl.u32 %v506, 7
        %v508 = vsub.s32 0, %v507
        %v509 = vrot.slane %v504, %v508
        %v519 = vunpack.c.l.b16 %v491
        %v520 = vunpack.c.l.b16 %v492
        %v521 = vunpack.c.l.b16 %v493
        %v522 = vunpack.c.l.b16 %v494
        %v523 = vunpack.c.l.b16 %v495
        %v524 = vunpack.c.l.b16 %v496
        %v525 = vunpack.c.l.b16 %v497
        %v526 = vunpack.c.l.b16 %v498
        %v527 = vpack.c.b16 %v520, %v519
        %v528 = vpack.c.b16 %v522, %v521
        %v529 = vpack.c.b16 %v524, %v523
        %v530 = vpack.c.b16 %v526, %v525
        %v536 = vunpack.c.l.b16 %v499
        %v537 = vunpack.c.l.b16 %v500
        %v538 = vunpack.c.l.b16 %v501
        %v539 = vunpack.c.l.b16 %v502
        %v540 = vunpack.c.l.b16 %v503
        %v541 = vpack.c.b16 %v537, %v536
        %v542 = vpack.c.b16 %v539, %v538
        %v543 = vpack.c.b16 %v540, %v540
        %vm546 = vcmask 293888
        %v548 = vsel %vm546, %v527, 0
        %v551 = vsel %vm546, %v528, 0
        %v554 = vsel %vm546, %v529, 0
        %v557 = vsel %vm546, %v530, 0
        %vm559 = vcmask 1041408
        %v561 = vsel %vm559, %v543, 0
        %563 = vmatprep.subr.bf16.mxu0 0
        %564 = vmatpush1.bf16.msra.mxu0 %v541
        %565 = vmatprep.subr.bf16.mxu0 0
        %566 = vmatpush1.bf16.msra.mxu0 %v542
        %567 = vmatprep.subr.bf16.mxu0 0
        %568 = vmatpush1.bf16.msra.mxu0 %v561
        %569 = vmatprep.subr.bf16.mxu0 0
        %570 = vmatpush1.bf16.msra.mxu0 0
        %571 = vmatprep.subr.bf16.mxu0 0
        %572 = vmatpush1.bf16.msra.mxu0 0
        %573 = vmatprep.subr.bf16.mxu0 0
        %574 = vmatpush1.bf16.msra.mxu0 0
        %575 = vmatprep.subr.bf16.mxu0 0
        %576 = vmatpush1.bf16.msra.mxu0 0
        %577 = vmatprep.subr.bf16.mxu0 0
        %578 = vmatpush1.bf16.msra.mxu0 0
        %579 = vmatprep.subr.bf16.mxu0 0
        %580 = vmatpush1.bf16.msra.mxu0 0
        %581 = vmatprep.subr.bf16.mxu0 0
        %582 = vmatpush1.bf16.msra.mxu0 0
        %583 = vmatprep.subr.bf16.mxu0 0
        %584 = vmatpush1.bf16.msra.mxu0 0
        %585 = vmatprep.subr.bf16.mxu0 0
        %586 = vmatpush1.bf16.msra.mxu0 0
        %587 = vmatprep.subr.bf16.mxu0 0
        %588 = vmatpush1.bf16.msra.mxu0 0
        %589 = vmatprep.subr.bf16.mxu0 0
        %590 = vmatpush1.bf16.msra.mxu0 0
        %591 = vmatprep.subr.bf16.mxu0 0
        %592 = vmatpush1.bf16.msra.mxu0 0
        %593 = vmatprep.subr.bf16.mxu0 0
        %594 = vmatpush1.bf16.msra.mxu0 0
        %595 = vmatprep.mubr.bf16.mxu0 0
        %596 = vmatmul.mubr.bf16.gmra.mrb[0].mxu0 %v548
        %v597 = vpop.f32.mrb[0].mxu0
        %v598 = vadd.f32 %v509, %v597
        %v599 = vpop.f32.mrb[0].mxu0
        %v600 = vpop.f32.mrb[0].mxu0
        %v601 = vadd.f32 %v509, %v600
        %v602 = vpop.f32.mrb[0].mxu0
        %603 = vmatprep.mubr.bf16.mxu0 0
        %604 = vmatmul.mubr.bf16.gmra.mrb[0].mxu0 %v551
        %v605 = vpop.f32.mrb[0].mxu0
        %v606 = vadd.f32 %v509, %v605
        %v607 = vpop.f32.mrb[0].mxu0
        %v608 = vpop.f32.mrb[0].mxu0
        %v609 = vadd.f32 %v509, %v608
        %v610 = vpop.f32.mrb[0].mxu0
        %611 = vmatprep.mubr.bf16.mxu0 0
        %612 = vmatmul.mubr.bf16.gmra.mrb[0].mxu0 %v554
        %v613 = vpop.f32.mrb[0].mxu0
        %v614 = vadd.f32 %v509, %v613
        %v615 = vpop.f32.mrb[0].mxu0
        %v616 = vpop.f32.mrb[0].mxu0
        %v617 = vadd.f32 %v509, %v616
        %v618 = vpop.f32.mrb[0].mxu0
        %619 = vmatprep.mubr.bf16.mxu0 0
        %620 = vmatmul.mubr.bf16.gmra.mrb[0].mxu0 %v557
        %v621 = vpop.f32.mrb[0].mxu0
        %v622 = vadd.f32 %v509, %v621
        %v623 = vpop.f32.mrb[0].mxu0
        %v624 = vpop.f32.mrb[0].mxu0
        %v625 = vadd.f32 %v509, %v624
        %v626 = vpop.f32.mrb[0].mxu0
        %627 = vdwg.mxu0
        %v628 = vmax.f32 %v598, 0.0
        %v629 = vmax.f32 %v601, 0.0
        %v630 = vmax.f32 %v606, 0.0
        %v631 = vmax.f32 %v609, 0.0
        %v632 = vmax.f32 %v614, 0.0
        %v633 = vmax.f32 %v617, 0.0
        %v634 = vmax.f32 %v622, 0.0
        %v635 = vmax.f32 %v625, 0.0
        %s636 = smul.u32 %s33, 64
        %v637 = vlaneseq
        %v638 = vand.u32 %v637, 127
        %v639 = vstv %s636
        %v640 = vadd.s32 %v639, %v638
        %vm641 = vcmp.lt.s32.totalorder %v640, 64
        %v642 = vsel %vm641, 1.0, 0.0
        %v643 = vld [vmem:[#allocation2] sm:$0x1]
        %vm644 = vcmask 523264
        %v646 = vsel %vm644, %v642, 0
        %648 = vmatprep.subr.mxu0 0.0
        %649 = vmatpush1.msra.mxu0 %v628
        %650 = vmatprep.subr.mxu0 0.0
        %651 = vmatpush1.msra.mxu0 %v629
        %652 = vmatprep.subr.mxu0 0.0
        %653 = vmatpush1.msra.mxu0 %v630
        %654 = vmatprep.subr.mxu0 0.0
        %655 = vmatpush1.msra.mxu0 %v631
        %656 = vmatprep.subr.mxu0 0.0
        %657 = vmatpush1.msra.mxu0 %v632
        %658 = vmatprep.subr.mxu0 0.0
        %659 = vmatpush1.msra.mxu0 %v633
        %660 = vmatprep.subr.mxu0 0.0
        %661 = vmatpush1.msra.mxu0 %v634
        %662 = vmatprep.subr.mxu0 0.0
        %663 = vmatpush1.msra.mxu0 %v635
        %664 = vmatprep.subr.mxu0 0.0
        %665 = vmatpush1.msra.mxu0 0.0
        %666 = vmatprep.subr.mxu0 0.0
        %667 = vmatpush1.msra.mxu0 0.0
        %668 = vmatprep.subr.mxu0 0.0
        %669 = vmatpush1.msra.mxu0 0.0
        %670 = vmatprep.subr.mxu0 0.0
        %671 = vmatpush1.msra.mxu0 0.0
        %672 = vmatprep.subr.mxu0 0.0
        %673 = vmatpush1.msra.mxu0 0.0
        %674 = vmatprep.subr.mxu0 0.0
        %675 = vmatpush1.msra.mxu0 0.0
        %676 = vmatprep.subr.mxu0 0.0
        %677 = vmatpush1.msra.mxu0 0.0
        %678 = vmatprep.subr.mxu0 0.0
        %679 = vmatpush1.msra.mxu0 0.0
        %680 = vmatprep.subr.mxu0 0.0
        %681 = vmatpush1.msra.mxu0 0.0
        %682 = vmatprep.subr.mxu0 0.0
        %683 = vmatpush1.msra.mxu0 0.0
        %684 = vmatprep.subr.mxu0 0.0
        %685 = vmatpush1.msra.mxu0 0.0
        %686 = vmatprep.subr.mxu0 0.0
        %687 = vmatpush1.msra.mxu0 0.0
        %688 = vmatprep.subr.mxu0 0.0
        %689 = vmatpush1.msra.mxu0 0.0
        %690 = vmatprep.subr.mxu0 0.0
        %691 = vmatpush1.msra.mxu0 0.0
        %692 = vmatprep.subr.mxu0 0.0
        %693 = vmatpush1.msra.mxu0 0.0
        %694 = vmatprep.subr.mxu0 0.0
        %695 = vmatpush1.msra.mxu0 0.0
        %696 = vmatprep.subr.mxu0 0.0
        %697 = vmatpush1.msra.mxu0 0.0
        %698 = vmatprep.subr.mxu0 0.0
        %699 = vmatpush1.msra.mxu0 0.0
        %700 = vmatprep.subr.mxu0 0.0
        %701 = vmatpush1.msra.mxu0 0.0
        %702 = vmatprep.subr.mxu0 0.0
        %703 = vmatpush1.msra.mxu0 0.0
        %704 = vmatprep.subr.mxu0 0.0
        %705 = vmatpush1.msra.mxu0 0.0
        %706 = vmatprep.subr.mxu0 0.0
        %707 = vmatpush1.msra.mxu0 0.0
        %708 = vmatprep.subr.mxu0 0.0
        %709 = vmatpush1.msra.mxu0 0.0
        %710 = vmatprep.subr.mxu0 0.0
        %711 = vmatpush1.msra.mxu0 0.0
        %712 = vmatprep.mubr.f32.mxu0 0.0
        %713 = vmatmul.mubr.f32.gmra.mrb[0].mxu0 %v646
        %v714 = vpop.f32.mrb[0].mxu0
        %v715 = vadd.f32 0.0, %v714
        %v716 = vpop.f32.mrb[0].mxu0
        %717 = vdwg.mxu0
        %v718 = vadd.f32 %v643, %v715
        %719 = vst [vmem:[#allocation2] sm:$0x1] %v718
        // Predicated region
        $region85: #{tpu_custom_call.1} parent=63 // pred_check
          %p720 = pneg %p486
        $region86: #{tpu_custom_call.1} parent=63 // pred_check_branch
          %722 = sbr.rel (%p720) target = $region88
        $region87: #{tpu_custom_call.1} parent=63 // pred_region
          %v723 = vld [vmem:[#allocation2] sm:$0x1]
          %v724 = vmul.f32 %v723, 0.015625
          %v725 = vpack.c.bf16 %v724, %v724
          %v726 = vld [vmem:[#allocation6] sm:$0xf]
          %v727 = vld [vmem:[#allocation6 + $0x4] sm:$0xf]
          %v728 = vld [vmem:[#allocation6 + $0x8] sm:$0xf]
          %v729 = vld [vmem:[#allocation6 + $0xc] sm:$0xf]
          %v730 = vld [vmem:[#allocation6 + $0x10] sm:$0xf]
          %v731 = vld [vmem:[#allocation6 + $0x14] sm:$0xf]
          %v732 = vld [vmem:[#allocation6 + $0x18] sm:$0xf]
          %v733 = vld [vmem:[#allocation6 + $0x1c] sm:$0xf]
          %v734 = vld [vmem:[#allocation6 + $0x20] sm:$0xf]
          %v735 = vld [vmem:[#allocation6 + $0x24] sm:$0xf]
          %v736 = vld [vmem:[#allocation6 + $0x28] sm:$0xf]
          %v737 = vld [vmem:[#allocation6 + $0x2c] sm:$0xf]
          %v738 = vld [vmem:[#allocation6 + $0x30] sm:$0xf]
          %v739 = vld [vmem:[#allocation6 + $0x34] sm:$0xf]
          %v740 = vld [vmem:[#allocation6 + $0x38] sm:$0xf]
          %v741 = vld [vmem:[#allocation6 + $0x3c] sm:$0xf]
          %v742 = vld [vmem:[%s4] sm:$0x1]
          %v759 = vunpack.c.l.b16 %v726
          %v760 = vunpack.c.l.b16 %v727
          %v761 = vunpack.c.l.b16 %v728
          %v762 = vunpack.c.l.b16 %v729
          %v763 = vunpack.c.l.b16 %v730
          %v764 = vunpack.c.l.b16 %v731
          %v765 = vunpack.c.l.b16 %v732
          %v766 = vunpack.c.l.b16 %v733
          %v767 = vunpack.c.l.b16 %v734
          %v768 = vunpack.c.l.b16 %v735
          %v769 = vunpack.c.l.b16 %v736
          %v770 = vunpack.c.l.b16 %v737
          %v771 = vunpack.c.l.b16 %v738
          %v772 = vunpack.c.l.b16 %v739
          %v773 = vunpack.c.l.b16 %v740
          %v774 = vunpack.c.l.b16 %v741
          %v775 = vpack.c.b16 %v760, %v759
          %v776 = vpack.c.b16 %v762, %v761
          %v777 = vpack.c.b16 %v764, %v763
          %v778 = vpack.c.b16 %v766, %v765
          %v779 = vpack.c.b16 %v768, %v767
          %v780 = vpack.c.b16 %v770, %v769
          %v781 = vpack.c.b16 %v772, %v771
          %v782 = vpack.c.b16 %v774, %v773
          %791 = vmatprep.subr.bf16.mxu0 0
          %792 = vmatpush1.bf16.msra.mxu0 %v775
          %793 = vmatprep.subr.bf16.mxu0 0
          %794 = vmatpush1.bf16.msra.mxu0 %v776
          %795 = vmatprep.subr.bf16.mxu0 0
          %796 = vmatpush1.bf16.msra.mxu0 %v777
          %797 = vmatprep.subr.bf16.mxu0 0
          %798 = vmatpush1.bf16.msra.mxu0 %v778
          %799 = vmatprep.subr.bf16.mxu0 0
          %800 = vmatpush1.bf16.msra.mxu0 %v779
          %801 = vmatprep.subr.bf16.mxu0 0
          %802 = vmatpush1.bf16.msra.mxu0 %v780
          %803 = vmatprep.subr.bf16.mxu0 0
          %804 = vmatpush1.bf16.msra.mxu0 %v781
          %805 = vmatprep.subr.bf16.mxu0 0
          %806 = vmatpush1.bf16.msra.mxu0 %v782
          %807 = vmatprep.subr.bf16.mxu0 0
          %808 = vmatpush1.bf16.msra.mxu0 0
          %809 = vmatprep.subr.bf16.mxu0 0
          %810 = vmatpush1.bf16.msra.mxu0 0
          %811 = vmatprep.subr.bf16.mxu0 0
          %812 = vmatpush1.bf16.msra.mxu0 0
          %813 = vmatprep.subr.bf16.mxu0 0
          %814 = vmatpush1.bf16.msra.mxu0 0
          %815 = vmatprep.subr.bf16.mxu0 0
          %816 = vmatpush1.bf16.msra.mxu0 0
          %817 = vmatprep.subr.bf16.mxu0 0
          %818 = vmatpush1.bf16.msra.mxu0 0
          %819 = vmatprep.subr.bf16.mxu0 0
          %820 = vmatpush1.bf16.msra.mxu0 0
          %821 = vmatprep.subr.bf16.mxu0 0
          %822 = vmatpush1.bf16.msra.mxu0 0
          %823 = vmatprep.mubr.bf16.mxu0 0
          %824 = vmatmul.mubr.bf16.gmra.mrb[0].mxu0 %v725
          %v825 = vpop.f32.mrb[0].mxu0
          %v826 = vadd.f32 %v742, %v825
          %v827 = vpop.f32.mrb[0].mxu0
          %v828 = vpop.f32.mrb[0].mxu0
          %v829 = vpop.f32.mrb[0].mxu0
          %830 = vdwg.mxu0
          %v831 = vld [vmem:[%s484] sm:$0x1]
          %v832 = vpack.c.bf16 %v826, %v826
          %v833 = vld [vmem:[#allocation8] sm:$0xff]
          %v834 = vld [vmem:[#allocation8 + $0x8] sm:$0xff]
          %v835 = vld [vmem:[#allocation8 + $0x10] sm:$0xff]
          %v836 = vld [vmem:[#allocation8 + $0x18] sm:$0xff]
          %v837 = vld [vmem:[#allocation8 + $0x20] sm:$0xff]
          %v838 = vld [vmem:[#allocation8 + $0x28] sm:$0xff]
          %v839 = vld [vmem:[#allocation8 + $0x30] sm:$0xff]
          %v840 = vld [vmem:[#allocation8 + $0x38] sm:$0xff]
          %v841 = vld [vmem:[#allocation8 + $0x40] sm:$0xff]
          %v842 = vld [vmem:[#allocation8 + $0x48] sm:$0xff]
          %v843 = vld [vmem:[#allocation8 + $0x50] sm:$0xff]
          %v844 = vld [vmem:[#allocation8 + $0x58] sm:$0xff]
          %v845 = vld [vmem:[#allocation8 + $0x60] sm:$0xff]
          %v846 = vld [vmem:[#allocation8 + $0x68] sm:$0xff]
          %v847 = vld [vmem:[#allocation8 + $0x70] sm:$0xff]
          %v848 = vld [vmem:[#allocation8 + $0x78] sm:$0xff]
          %v849 = vld [vmem:[#allocation9] sm:$0xff]
          %v850 = vld [vmem:[#allocation9 + $0x8] sm:$0xff]
          %v853 = vunpack.c.l.b16 %v849
          %v854 = vunpack.c.h.b16 %v849
          %v855 = vunpack.c.l.b16 %v850
          %v856 = vunpack.c.h.b16 %v850
          %v857 = vpack.c.b16 %v855, %v853
          %v858 = vpack.c.b16 %v856, %v854
          %vm861 = vcmask 130048
          %v863 = vsel %vm861, %v831, 0
          %865 = vmatprep.subr.bf16.mxu0 %v858
          %866 = vmatpush1.bf16.msra.mxu0 %v857
          %867 = vmatprep.subr.bf16.mxu0 0
          %868 = vmatpush1.bf16.msra.mxu0 0
          %869 = vmatprep.subr.bf16.mxu0 0
          %870 = vmatpush1.bf16.msra.mxu0 0
          %871 = vmatprep.subr.bf16.mxu0 0
          %872 = vmatpush1.bf16.msra.mxu0 0
          %873 = vmatprep.subr.bf16.mxu0 0
          %874 = vmatpush1.bf16.msra.mxu0 0
          %875 = vmatprep.subr.bf16.mxu0 0
          %876 = vmatpush1.bf16.msra.mxu0 0
          %877 = vmatprep.subr.bf16.mxu0 0
          %878 = vmatpush1.bf16.msra.mxu0 0
          %879 = vmatprep.subr.bf16.mxu0 0
          %880 = vmatpush1.bf16.msra.mxu0 0
          %881 = vmatprep.subr.bf16.mxu0 0
          %882 = vmatpush1.bf16.msra.mxu0 0
          %883 = vmatprep.subr.bf16.mxu0 0
          %884 = vmatpush1.bf16.msra.mxu0 0
          %885 = vmatprep.subr.bf16.mxu0 0
          %886 = vmatpush1.bf16.msra.mxu0 0
          %887 = vmatprep.subr.bf16.mxu0 0
          %888 = vmatpush1.bf16.msra.mxu0 0
          %889 = vmatprep.subr.bf16.mxu0 0
          %890 = vmatpush1.bf16.msra.mxu0 0
          %891 = vmatprep.subr.bf16.mxu0 0
          %892 = vmatpush1.bf16.msra.mxu0 0
          %893 = vmatprep.subr.bf16.mxu0 0
          %894 = vmatpush1.bf16.msra.mxu0 0
          %895 = vmatprep.subr.bf16.mxu0 0
          %896 = vmatpush1.bf16.msra.mxu0 0
          %897 = vmatprep.mubr.bf16.mxu0 0
          %898 = vmatmul.mubr.bf16.gmra.mrb[0].mxu0 %v863
          %v899 = vpop.f32.mrb[0].mxu0
          %v900 = vadd.f32 0.0, %v899
          %v901 = vpop.f32.mrb[0].mxu0
          %v902 = vadd.f32 0.0, %v901
          %v903 = vpop.f32.mrb[0].mxu0
          %v904 = vpop.f32.mrb[0].mxu0
          %905 = vdwg.mxu0
          %v922 = vunpack.c.l.b16 %v833
          %v923 = vunpack.c.h.b16 %v833
          %v924 = vunpack.c.l.b16 %v834
          %v925 = vunpack.c.h.b16 %v834
          %v926 = vunpack.c.l.b16 %v835
          %v927 = vunpack.c.h.b16 %v835
          %v928 = vunpack.c.l.b16 %v836
          %v929 = vunpack.c.h.b16 %v836
          %v930 = vunpack.c.l.b16 %v837
          %v931 = vunpack.c.h.b16 %v837
          %v932 = vunpack.c.l.b16 %v838
          %v933 = vunpack.c.h.b16 %v838
          %v934 = vunpack.c.l.b16 %v839
          %v935 = vunpack.c.h.b16 %v839
          %v936 = vunpack.c.l.b16 %v840
          %v937 = vunpack.c.h.b16 %v840
          %v938 = vunpack.c.l.b16 %v841
          %v939 = vunpack.c.h.b16 %v841
          %v940 = vunpack.c.l.b16 %v842
          %v941 = vunpack.c.h.b16 %v842
          %v942 = vunpack.c.l.b16 %v843
          %v943 = vunpack.c.h.b16 %v843
          %v944 = vunpack.c.l.b16 %v844
          %v945 = vunpack.c.h.b16 %v844
          %v946 = vunpack.c.l.b16 %v845
          %v947 = vunpack.c.h.b16 %v845
          %v948 = vunpack.c.l.b16 %v846
          %v949 = vunpack.c.h.b16 %v846
          %v950 = vunpack.c.l.b16 %v847
          %v951 = vunpack.c.h.b16 %v847
          %v952 = vunpack.c.l.b16 %v848
          %v953 = vunpack.c.h.b16 %v848
          %v954 = vpack.c.b16 %v924, %v922
          %v955 = vpack.c.b16 %v925, %v923
          %v956 = vpack.c.b16 %v928, %v926
          %v957 = vpack.c.b16 %v929, %v927
          %v958 = vpack.c.b16 %v932, %v930
          %v959 = vpack.c.b16 %v933, %v931
          %v960 = vpack.c.b16 %v936, %v934
          %v961 = vpack.c.b16 %v937, %v935
          %v962 = vpack.c.b16 %v940, %v938
          %v963 = vpack.c.b16 %v941, %v939
          %v964 = vpack.c.b16 %v944, %v942
          %v965 = vpack.c.b16 %v945, %v943
          %v966 = vpack.c.b16 %v948, %v946
          %v967 = vpack.c.b16 %v949, %v947
          %v968 = vpack.c.b16 %v952, %v950
          %v969 = vpack.c.b16 %v953, %v951
          %986 = vmatprep.subr.bf16.mxu0 %v955
          %987 = vmatpush1.bf16.msra.mxu0 %v954
          %988 = vmatprep.subr.bf16.mxu0 %v957
          %989 = vmatpush1.bf16.msra.mxu0 %v956
          %990 = vmatprep.subr.bf16.mxu0 %v959
          %991 = vmatpush1.bf16.msra.mxu0 %v958
          %992 = vmatprep.subr.bf16.mxu0 %v961
          %993 = vmatpush1.bf16.msra.mxu0 %v960
          %994 = vmatprep.subr.bf16.mxu0 %v963
          %995 = vmatpush1.bf16.msra.mxu0 %v962
          %996 = vmatprep.subr.bf16.mxu0 %v965
          %997 = vmatpush1.bf16.msra.mxu0 %v964
          %998 = vmatprep.subr.bf16.mxu0 %v967
          %999 = vmatpush1.bf16.msra.mxu0 %v966
          %1000 = vmatprep.subr.bf16.mxu0 %v969
          %1001 = vmatpush1.bf16.msra.mxu0 %v968
          %1002 = vmatprep.subr.bf16.mxu0 0
          %1003 = vmatpush1.bf16.msra.mxu0 0
          %1004 = vmatprep.subr.bf16.mxu0 0
          %1005 = vmatpush1.bf16.msra.mxu0 0
          %1006 = vmatprep.subr.bf16.mxu0 0
          %1007 = vmatpush1.bf16.msra.mxu0 0
          %1008 = vmatprep.subr.bf16.mxu0 0
          %1009 = vmatpush1.bf16.msra.mxu0 0
          %1010 = vmatprep.subr.bf16.mxu0 0
          %1011 = vmatpush1.bf16.msra.mxu0 0
          %1012 = vmatprep.subr.bf16.mxu0 0
          %1013 = vmatpush1.bf16.msra.mxu0 0
          %1014 = vmatprep.subr.bf16.mxu0 0
          %1015 = vmatpush1.bf16.msra.mxu0 0
          %1016 = vmatprep.subr.bf16.mxu0 0
          %1017 = vmatpush1.bf16.msra.mxu0 0
          %1018 = vmatprep.mubr.bf16.mxu0 0
          %1019 = vmatmul.mubr.bf16.gmra.mrb[0].mxu0 %v832
          %v1020 = vpop.f32.mrb[0].mxu0
          %v1021 = vadd.f32 %v900, %v1020
          %v1022 = vpop.f32.mrb[0].mxu0
          %v1023 = vadd.f32 %v902, %v1022
          %v1024 = vpop.f32.mrb[0].mxu0
          %v1025 = vpop.f32.mrb[0].mxu0
          %1026 = vdwg.mxu0
          %v1027 = vld [vmem:[%s8] sm:$0x3]
          %v1029 = vlaneseq
          %v1030 = vshrl.u32 %v1029, 7
          %v1031 = vsub.s32 0, %v1030
          %v1032 = vrot.slane %v1027, %v1031
          %v1033 = vlaneseq
          %v1034 = vshrl.u32 %v1033, 7
          %v1035 = vsub.s32 1, %v1034
          %v1036 = vrot.slane %v1027, %v1035
          %v1039 = vadd.f32 %v1021, %v1032
          %v1040 = vadd.f32 %v1023, %v1036
          %v1041 = vmax.f32 %v1039, 0.0
          %v1042 = vmax.f32 %v1040, 0.0
          %v1043 = vpack.c.bf16 %v1041, %v1041
          %v1044 = vpack.c.bf16 %v1042, %v1042
          %v1045 = vld [vmem:[%s9] sm:$0xf]
          %v1046 = vld [vmem:[%s9 + $0x4] sm:$0xf]
          %v1047 = vld [vmem:[%s9 + $0x8] sm:$0xf]
          %v1048 = vld [vmem:[%s9 + $0xc] sm:$0xf]
          %v1049 = vld [vmem:[%s9 + $0x10] sm:$0xf]
          %v1050 = vld [vmem:[%s9 + $0x14] sm:$0xf]
          %v1051 = vld [vmem:[%s9 + $0x18] sm:$0xf]
          %v1052 = vld [vmem:[%s9 + $0x1c] sm:$0xf]
          %v1053 = vld [vmem:[%s9 + $0x20] sm:$0xf]
          %v1054 = vld [vmem:[%s9 + $0x24] sm:$0xf]
          %v1055 = vld [vmem:[%s9 + $0x28] sm:$0xf]
          %v1056 = vld [vmem:[%s9 + $0x2c] sm:$0xf]
          %v1057 = vld [vmem:[%s9 + $0x30] sm:$0xf]
          %v1058 = vld [vmem:[%s9 + $0x34] sm:$0xf]
          %v1059 = vld [vmem:[%s9 + $0x38] sm:$0xf]
          %v1060 = vld [vmem:[%s9 + $0x3c] sm:$0xf]
          %v1061 = vld [vmem:[%s9 + $0x40] sm:$0xf]
          %v1062 = vld [vmem:[%s9 + $0x44] sm:$0xf]
          %v1063 = vld [vmem:[%s9 + $0x48] sm:$0xf]
          %v1064 = vld [vmem:[%s9 + $0x4c] sm:$0xf]
          %v1065 = vld [vmem:[%s9 + $0x50] sm:$0xf]
          %v1066 = vld [vmem:[%s9 + $0x54] sm:$0xf]
          %v1067 = vld [vmem:[%s9 + $0x58] sm:$0xf]
          %v1068 = vld [vmem:[%s9 + $0x5c] sm:$0xf]
          %v1069 = vld [vmem:[%s9 + $0x60] sm:$0xf]
          %v1070 = vld [vmem:[%s9 + $0x64] sm:$0xf]
          %v1071 = vld [vmem:[%s9 + $0x68] sm:$0xf]
          %v1072 = vld [vmem:[%s9 + $0x6c] sm:$0xf]
          %v1073 = vld [vmem:[%s9 + $0x70] sm:$0xf]
          %v1074 = vld [vmem:[%s9 + $0x74] sm:$0xf]
          %v1075 = vld [vmem:[%s9 + $0x78] sm:$0xf]
          %v1076 = vld [vmem:[%s9 + $0x7c] sm:$0xf]
          %v1077 = vld [vmem:[%s10] sm:$0x1]
          %v1110 = vunpack.c.l.b16 %v1045
          %v1111 = vunpack.c.l.b16 %v1046
          %v1112 = vunpack.c.l.b16 %v1047
          %v1113 = vunpack.c.l.b16 %v1048
          %v1114 = vunpack.c.l.b16 %v1049
          %v1115 = vunpack.c.l.b16 %v1050
          %v1116 = vunpack.c.l.b16 %v1051
          %v1117 = vunpack.c.l.b16 %v1052
          %v1118 = vunpack.c.l.b16 %v1053
          %v1119 = vunpack.c.l.b16 %v1054
          %v1120 = vunpack.c.l.b16 %v1055
          %v1121 = vunpack.c.l.b16 %v1056
          %v1122 = vunpack.c.l.b16 %v1057
          %v1123 = vunpack.c.l.b16 %v1058
          %v1124 = vunpack.c.l.b16 %v1059
          %v1125 = vunpack.c.l.b16 %v1060
          %v1126 = vunpack.c.l.b16 %v1061
          %v1127 = vunpack.c.l.b16 %v1062
          %v1128 = vunpack.c.l.b16 %v1063
          %v1129 = vunpack.c.l.b16 %v1064
          %v1130 = vunpack.c.l.b16 %v1065
          %v1131 = vunpack.c.l.b16 %v1066
          %v1132 = vunpack.c.l.b16 %v1067
          %v1133 = vunpack.c.l.b16 %v1068
          %v1134 = vunpack.c.l.b16 %v1069
          %v1135 = vunpack.c.l.b16 %v1070
          %v1136 = vunpack.c.l.b16 %v1071
          %v1137 = vunpack.c.l.b16 %v1072
          %v1138 = vunpack.c.l.b16 %v1073
          %v1139 = vunpack.c.l.b16 %v1074
          %v1140 = vunpack.c.l.b16 %v1075
          %v1141 = vunpack.c.l.b16 %v1076
          %v1142 = vpack.c.b16 %v1111, %v1110
          %v1143 = vpack.c.b16 %v1113, %v1112
          %v1144 = vpack.c.b16 %v1115, %v1114
          %v1145 = vpack.c.b16 %v1117, %v1116
          %v1146 = vpack.c.b16 %v1119, %v1118
          %v1147 = vpack.c.b16 %v1121, %v1120
          %v1148 = vpack.c.b16 %v1123, %v1122
          %v1149 = vpack.c.b16 %v1125, %v1124
          %v1150 = vpack.c.b16 %v1127, %v1126
          %v1151 = vpack.c.b16 %v1129, %v1128
          %v1152 = vpack.c.b16 %v1131, %v1130
          %v1153 = vpack.c.b16 %v1133, %v1132
          %v1154 = vpack.c.b16 %v1135, %v1134
          %v1155 = vpack.c.b16 %v1137, %v1136
          %v1156 = vpack.c.b16 %v1139, %v1138
          %v1157 = vpack.c.b16 %v1141, %v1140
          %1174 = vmatprep.subr.bf16.mxu0 0
          %1175 = vmatpush1.bf16.msra.mxu0 %v1142
          %1176 = vmatprep.subr.bf16.mxu0 0
          %1177 = vmatpush1.bf16.msra.mxu0 %v1143
          %1178 = vmatprep.subr.bf16.mxu0 0
          %1179 = vmatpush1.bf16.msra.mxu0 %v1144
          %1180 = vmatprep.subr.bf16.mxu0 0
          %1181 = vmatpush1.bf16.msra.mxu0 %v1145
          %1182 = vmatprep.subr.bf16.mxu0 0
          %1183 = vmatpush1.bf16.msra.mxu0 %v1146
          %1184 = vmatprep.subr.bf16.mxu0 0
          %1185 = vmatpush1.bf16.msra.mxu0 %v1147
          %1186 = vmatprep.subr.bf16.mxu0 0
          %1187 = vmatpush1.bf16.msra.mxu0 %v1148
          %1188 = vmatprep.subr.bf16.mxu0 0
          %1189 = vmatpush1.bf16.msra.mxu0 %v1149
          %1190 = vmatprep.subr.bf16.mxu0 0
          %1191 = vmatpush1.bf16.msra.mxu0 %v1150
          %1192 = vmatprep.subr.bf16.mxu0 0
          %1193 = vmatpush1.bf16.msra.mxu0 %v1151
          %1194 = vmatprep.subr.bf16.mxu0 0
          %1195 = vmatpush1.bf16.msra.mxu0 %v1152
          %1196 = vmatprep.subr.bf16.mxu0 0
          %1197 = vmatpush1.bf16.msra.mxu0 %v1153
          %1198 = vmatprep.subr.bf16.mxu0 0
          %1199 = vmatpush1.bf16.msra.mxu0 %v1154
          %1200 = vmatprep.subr.bf16.mxu0 0
          %1201 = vmatpush1.bf16.msra.mxu0 %v1155
          %1202 = vmatprep.subr.bf16.mxu0 0
          %1203 = vmatpush1.bf16.msra.mxu0 %v1156
          %1204 = vmatprep.subr.bf16.mxu0 0
          %1205 = vmatpush1.bf16.msra.mxu0 %v1157
          %1206 = vmatprep.mubr.bf16.mxu0 %v1044
          %1207 = vmatmul.mubr.bf16.gmra.mrb[0].mxu0 %v1043
          %v1208 = vpop.f32.mrb[0].mxu0
          %v1209 = vadd.f32 %v1077, %v1208
          %v1210 = vpop.f32.mrb[0].mxu0
          %v1211 = vpop.f32.mrb[0].mxu0
          %v1212 = vpop.f32.mrb[0].mxu0
          %1213 = vdwg.mxu0
          %1214 = vst [vmem:[%s471] sm:$0x1] %v1209
        $region88: #{tpu_custom_call.1} parent=63 // pred_fallthru
          _
        %s1215 = sand.u32 %s291, 1
        %s1216 = scalar_lea.sflag [#allocation5], %s1215
        %s1217 = sand.u32 %s291, 1
        %s1218 = scalar_lea.vmem [#allocation11], %s1217
        // Predicated region
        $region89: #{tpu_custom_call.1} parent=63 // pred_check
          %p1219 = pneg %p301
        $region90: #{tpu_custom_call.1} parent=63 // pred_check_branch
          %1221 = sbr.rel (%p1219) target = $region92
        $region91: #{tpu_custom_call.1} parent=63 // pred_region
          %s1223 = ssub.s32 16, 16
          %1224 = vsyncadd %s1216, %s1223
          %s1225 = smul.addr %s32, 16
          %s1226 = scalar_lea.hbm %s11, %s1225
          %s1228 = sshll.u32 %s1218, 4
          %s1229 = int_to_ptr.vmem [resolvable:$true] %s1228
          %1231 = dma.vmem_to_hbm [thread:$0]  %s1229, 16, %s1226, %s1216
        $region92: #{tpu_custom_call.1} parent=63 // pred_fallthru
          _
      $region64: #{tpu_custom_call.1} parent=5 // pred_fallthru
        _
      %p1232 = scmp.le.s32.totalorder 2, %s23
      // Predicated region
      $region93: #{tpu_custom_call.1} parent=5 // pred_check
        %p1233 = pneg %p1232
      $region94: #{tpu_custom_call.1} parent=5 // pred_check_branch
        %1235 = sbr.rel (%p1233) target = $region96
      $region95: #{tpu_custom_call.1} parent=5 // pred_region
        %s1236 = ssub.s32 %s23, 2
        // Predicated region
        $region97: #{tpu_custom_call.1} parent=95 // pred_check
          %p1237 = pneg %p307
        $region98: #{tpu_custom_call.1} parent=95 // pred_check_branch
          %1239 = sbr.rel (%p1237) target = $region100
        $region99: #{tpu_custom_call.1} parent=95 // pred_region
          %s1240 = sand.u32 %s292, 1
          %s1241 = scalar_lea.sflag [#allocation5], %s1240
          %s1242 = sand.u32 %s292, 1
          %s1243 = scalar_lea.vmem [#allocation11], %s1242
          %1244 = dma.done %s1241, 16
        $region100: #{tpu_custom_call.1} parent=95 // pred_fallthru
          _
      $region96: #{tpu_custom_call.1} parent=5 // pred_fallthru
        _
    $region6: #{tpu_custom_call.1} parent=1 // loop_footer
      %s27 = sadd.s32 1, %s23
    $region7: #{tpu_custom_call.1} parent=1 // loop_footer_branch
      %22 = sbr.rel target = $region3
    $region8: #{tpu_custom_call.1} parent=1 // loop_exit
      _
    %1245 = vsyncpa [#allocation4], 1
    %s1246 = scalar_lea.sflag [#allocation4], 1
    %1247 = vsyncpa %s1246, 1
    %1248 = vsyncpa [#allocation7], 1
    %1249 = vsyncpa [#allocation10], 1
    %1250 = vsyncpa [#allocation5], 1
    %s1251 = scalar_lea.sflag [#allocation5], 1
    %1252 = vsyncpa %s1251, 1

</llo_original>
